<compile_context>
chip_gen: v6e
topology: v6e:2x2x1
jax: 0.10.0
libtpu: 0.0.40
codegen_flags: <defaults>
</compile_context>

<pallas_src>
import functools

import jax
import jax.numpy as jnp
from jax.experimental import pallas as pl
from jax.experimental.pallas import tpu as pltpu


def _round_up(a: int, b: int) -> int:
    return (a + b - 1) // b * b


def _lora_kernel(x_ref, wb_ref, wa_ref, wl_ref, bo_ref, o_ref,
                 acc_ref, h_ref, *, tk):
    """Grid = (i rows [parallel], j out-cols, k in-cols reduction [innermost])."""
    j = pl.program_id(1)
    k = pl.program_id(2)
    nk = pl.num_programs(2)

    @pl.when(k == 0)
    def _():
        acc_ref[...] = jnp.zeros_like(acc_ref)

    x = x_ref[...]
    # Base branch: accumulate x @ Wb^T over the k (in_features) axis.
    acc_ref[...] += jnp.dot(x, wb_ref[...], preferred_element_type=jnp.float32)

    # LoRA down-projection h = x @ Wa^T: computed only during the first
    # out-column sweep (j == 0); reused for all j > 0 via persistent scratch.
    @pl.when(jnp.logical_and(j == 0, k == 0))
    def _():
        h_ref[...] = jnp.zeros_like(h_ref)

    @pl.when(j == 0)
    def _():
        k_start = pl.multiple_of(k * tk, tk)
        wa_k = wa_ref[pl.ds(k_start, tk), :]          # Wa^T fully VMEM-resident
        h_ref[...] += jnp.dot(x, wa_k, preferred_element_type=jnp.float32)

    @pl.when(k == nk - 1)
    def _():
        h = h_ref[...].astype(wl_ref.dtype)
        lora = jnp.dot(h, wl_ref[...], preferred_element_type=jnp.float32)
        o_ref[...] = (acc_ref[...] + lora + bo_ref[...]).astype(o_ref.dtype)


def lora_forward(x, w_base, b_base, w_a, b_a, w_b, b_b, *,
                 alpha=16.0,
                 tm=512, tn=512, tk=512,
                 compute_dtype=None,
                 vmem_limit_bytes=48 * 1024 * 1024):
    """x: (..., in_f); w_base: (out_f, in_f); w_a: (r, in_f); w_b: (out_f, r)."""
    *lead, in_f = x.shape
    out_f = w_base.shape[0]
    r = w_a.shape[0]
    scale = float(alpha) / float(r)
    cdt = compute_dtype if compute_dtype is not None else x.dtype

    x2 = x.reshape(-1, in_f)
    M = x2.shape[0]

    # Effective tile sizes (clamped for small problems), padded problem sizes.
    tm_e = min(tm, _round_up(M, 8))
    tn_e = min(tn, _round_up(out_f, 128))
    tk_e = min(tk, _round_up(in_f, 128))
    M_p = _round_up(M, tm_e)
    out_p = _round_up(out_f, tn_e)
    in_p = _round_up(in_f, tk_e)
    r_p = _round_up(r, 128)                 # lane-dense LoRA rank

    # ---- trace-time glue: transpose, cast, fold scale + all biases, zero-pad ----
    x_p = jnp.pad(x2.astype(cdt), ((0, M_p - M), (0, in_p - in_f)))
    wb_p = jnp.pad(w_base.T.astype(cdt), ((0, in_p - in_f), (0, out_p - out_f)))
    wa_p = jnp.pad(w_a.T.astype(cdt), ((0, in_p - in_f), (0, r_p - r)))
    wl_scaled = (w_b.T.astype(jnp.float32) * scale).astype(cdt)
    wl_p = jnp.pad(wl_scaled, ((0, r_p - r), (0, out_p - out_f)))
    # y = x Wb^T + b_base + s*((x Wa^T + b_a) Wl^T + b_l)
    #   = x Wb^T + [s*(x Wa^T)] Wl^T + [b_base + s*(b_a Wl^T + b_l)]
    bo = (b_base.astype(jnp.float32)
          + scale * (b_a.astype(jnp.float32) @ w_b.T.astype(jnp.float32)
                     + b_b.astype(jnp.float32)))
    bo_p = jnp.pad(bo, (0, out_p - out_f)).reshape(1, out_p)

    grid = (M_p // tm_e, out_p // tn_e, in_p // tk_e)
    kernel = functools.partial(_lora_kernel, tk=tk_e)

    itemsize = jnp.dtype(cdt).itemsize
    flops = 2 * M_p * (in_p * out_p + in_p * r_p + r_p * out_p)
    bytes_accessed = ((M_p * in_p + in_p * out_p + in_p * r_p + r_p * out_p) * itemsize
                      + out_p * 4 + M_p * out_p * jnp.dtype(x.dtype).itemsize)

    out = pl.pallas_call(
        kernel,
        out_shape=jax.ShapeDtypeStruct((M_p, out_p), x.dtype),
        grid_spec=pltpu.PrefetchScalarGridSpec(
            num_scalar_prefetch=0,
            grid=grid,
            in_specs=[
                pl.BlockSpec((tm_e, tk_e), lambda i, j, k: (i, k)),   # x row tile
                pl.BlockSpec((tk_e, tn_e), lambda i, j, k: (k, j)),   # base W^T tile
                pl.BlockSpec((in_p, r_p), lambda i, j, k: (0, 0)),    # LoRA A^T (resident)
                pl.BlockSpec((r_p, tn_e), lambda i, j, k: (0, j)),    # scale * LoRA B^T
                pl.BlockSpec((1, tn_e), lambda i, j, k: (0, j)),      # fused output bias
            ],
            out_specs=pl.BlockSpec((tm_e, tn_e), lambda i, j, k: (i, j)),
            scratch_shapes=[
                pltpu.VMEM((tm_e, tn_e), jnp.float32),   # base accumulator
                pltpu.VMEM((tm_e, r_p), jnp.float32),    # LoRA hidden h = x @ Wa^T
            ],
        ),
        compiler_params=pltpu.CompilerParams(
            # k is the reduction (last, "arbitrary"); j is "arbitrary" so the
            # cross-j reuse of the h scratch stays on one core; i is megacore-parallel.
            dimension_semantics=("parallel", "arbitrary", "arbitrary"),
            vmem_limit_bytes=vmem_limit_bytes,
        ),
        cost_estimate=pl.CostEstimate(flops=flops, transcendentals=0,
                                      bytes_accessed=bytes_accessed),
    )(x_p, wb_p, wa_p, wl_p, bo_p)

    y = out[:M, :out_f]
    return y.reshape(*lead, out_f)


def _reference(x, w_base, b_base, w_a, b_a, w_b, b_b, alpha, r):
    base = x @ w_base.T + b_base
    lora = (x @ w_a.T + b_a) @ w_b.T + b_b
    return lora * (alpha / r) + base


if __name__ == "__main__":
    # ---- test 1: small module-sized shapes (single grid step) ----
    batch, seq, in_f, out_f, r, alpha = 2, 8, 32, 32, 8, 16.0
    ks = jax.random.split(jax.random.PRNGKey(0), 7)
    x = jax.random.normal(ks[0], (batch, seq, in_f), dtype=jnp.float32)
    w_base = jax.random.normal(ks[1], (out_f, in_f), dtype=jnp.float32) * 0.1
    b_base = jax.random.normal(ks[2], (out_f,), dtype=jnp.float32) * 0.1
    w_a = jax.random.normal(ks[3], (r, in_f), dtype=jnp.float32) * 0.1
    b_a = jax.random.normal(ks[4], (r,), dtype=jnp.float32) * 0.1
    w_b = jax.random.normal(ks[5], (out_f, r), dtype=jnp.float32) * 0.1
    b_b = jax.random.normal(ks[6], (out_f,), dtype=jnp.float32) * 0.1

    ref = _reference(x, w_base, b_base, w_a, b_a, w_b, b_b, alpha, r)

    out = lora_forward(x, w_base, b_base, w_a, b_a, w_b, b_b, alpha=alpha)
    jax.block_until_ready(out)
    assert out.shape == ref.shape
    assert jnp.allclose(out, ref, atol=1e-4, rtol=1e-4), "f32 mismatch vs reference"

    # bf16 compute path (recommended for v5e/v6e/v7x MXU); f32 accumulation inside.
    out_bf16 = lora_forward(x, w_base, b_base, w_a, b_a, w_b, b_b, alpha=alpha,
                            compute_dtype=jnp.bfloat16)
    jax.block_until_ready(out_bf16)
    assert jnp.allclose(out_bf16, ref, atol=1e-1, rtol=1e-1), "bf16 mismatch vs reference"

    # ---- test 2: exercise the (i, j, k) tiling / accumulator / h-reuse path ----
    M2, in2, out2, r2 = 64, 256, 256, 8
    k2 = jax.random.split(jax.random.PRNGKey(1), 7)
    x_t2 = jax.random.normal(k2[0], (M2, in2), dtype=jnp.float32)
    wb_t2 = jax.random.normal(k2[1], (out2, in2), dtype=jnp.float32) * 0.05
    bb_t2 = jax.random.normal(k2[2], (out2,), dtype=jnp.float32) * 0.05
    wa_t2 = jax.random.normal(k2[3], (r2, in2), dtype=jnp.float32) * 0.05
    ba_t2 = jax.random.normal(k2[4], (r2,), dtype=jnp.float32) * 0.05
    wl_t2 = jax.random.normal(k2[5], (out2, r2), dtype=jnp.float32) * 0.05
    bl_t2 = jax.random.normal(k2[6], (out2,), dtype=jnp.float32) * 0.05

    out_t2 = lora_forward(x_t2, wb_t2, bb_t2, wa_t2, ba_t2, wl_t2, bl_t2,
                          alpha=alpha, tm=16, tn=128, tk=128)  # grid (4, 2, 2)
    jax.block_until_ready(out_t2)
    ref_t2 = _reference(x_t2, wb_t2, bb_t2, wa_t2, ba_t2, wl_t2, bl_t2, alpha, r2)
    assert jnp.allclose(out_t2, ref_t2, atol=1e-3, rtol=1e-3), "tiled mismatch vs reference"

    # TODO(synk): nn.Dropout branch of lora_net is only active when dropout>0; the
    # default (dropout=0) is an identity and is intentionally not implemented here.
    print("KERNEL_OK")
</pallas_src>

<mosaic_0001>
module attributes {stable_mosaic.version = 11 : i64} {
  func.func @_lora_kernel(%arg0: i32, %arg1: i32, %arg2: i32, %arg3: memref<16x128xf32, #tpu.memory_space<vmem>>, %arg4: memref<128x128xf32, #tpu.memory_space<vmem>>, %arg5: memref<128x128xf32, #tpu.memory_space<vmem>>, %arg6: memref<128x128xf32, #tpu.memory_space<vmem>>, %arg7: memref<1x128xf32, #tpu.memory_space<vmem>>, %arg8: memref<16x128xf32, #tpu.memory_space<vmem>>, %arg9: memref<16x128xf32, #tpu.memory_space<vmem>>, %arg10: memref<16x128xf32, #tpu.memory_space<vmem>>) attributes {dimension_semantics = [#tpu.dimension_semantics<parallel>, #tpu.dimension_semantics<arbitrary>, #tpu.dimension_semantics<arbitrary>], iteration_bounds = array<i64: 1, 1, 1>, scalar_prefetch = 0 : i64, scratch_operands = 2 : i64, tpu.core_type = #tpu.core_type<tc>, window_params = [{transform_indices = @transform_0, window_bounds = array<i64: 16, 128>}, {transform_indices = @transform_1, window_bounds = array<i64: 128, 128>}, {pipeline_mode = #tpu.pipeline_mode<synchronous>, transform_indices = @transform_2, window_bounds = array<i64: 128, 128>}, {transform_indices = @transform_3, window_bounds = array<i64: 128, 128>}, {transform_indices = @transform_4, window_bounds = array<i64: 1, 128>}, {transform_indices = @transform_5, window_bounds = array<i64: 16, 128>}]} {
    %c0_i32 = arith.constant 0 : i32
    %0 = arith.cmpi eq, %arg2, %c0_i32 : i32
    %1 = arith.extui %0 : i1 to i32
    %c0_i32_0 = arith.constant 0 : i32
    %2 = arith.cmpi ne, %1, %c0_i32_0 : i32
    scf.if %2 {
      %cst_15 = arith.constant 0.000000e+00 : f32
      %20 = vector.broadcast %cst_15 : f32 to vector<16x128xf32>
      %c0_16 = arith.constant 0 : index
      %c0_17 = arith.constant 0 : index
      %21 = vector.load %arg9[%c0_16, %c0_17] : memref<16x128xf32, #tpu.memory_space<vmem>>, vector<16x128xf32>
      tpu.vector_store %arg9[%c0_16, %c0_17], %20 {strides = array<i32>} : memref<16x128xf32, #tpu.memory_space<vmem>>, vector<16x128xf32>,
    } else {
    }
    %c0 = arith.constant 0 : index
    %c0_1 = arith.constant 0 : index
    %3 = vector.load %arg3[%c0, %c0_1] : memref<16x128xf32, #tpu.memory_space<vmem>>, vector<16x128xf32>
    %c0_2 = arith.constant 0 : index
    %c0_3 = arith.constant 0 : index
    %4 = vector.load %arg9[%c0_2, %c0_3] : memref<16x128xf32, #tpu.memory_space<vmem>>, vector<16x128xf32>
    %c0_4 = arith.constant 0 : index
    %c0_5 = arith.constant 0 : index
    %5 = vector.load %arg4[%c0_4, %c0_5] : memref<128x128xf32, #tpu.memory_space<vmem>>, vector<128x128xf32>
    %cst = arith.constant dense<0.000000e+00> : vector<16x128xf32>
    %6 = tpu.matmul %3, %5, %cst {dimension_numbers = #tpu.dot_dimension_numbers<[1], [0], [0], [1], [0, 0, 1, 1], [], []>} : vector<16x128xf32>, vector<128x128xf32>, vector<16x128xf32> -> vector<16x128xf32>
    %7 = arith.addf %4, %6 : vector<16x128xf32>
    %c0_6 = arith.constant 0 : index
    %c0_7 = arith.constant 0 : index
    %8 = vector.load %arg9[%c0_6, %c0_7] : memref<16x128xf32, #tpu.memory_space<vmem>>, vector<16x128xf32>
    tpu.vector_store %arg9[%c0_6, %c0_7], %7 {strides = array<i32>} : memref<16x128xf32, #tpu.memory_space<vmem>>, vector<16x128xf32>,
    %c0_i32_8 = arith.constant 0 : i32
    %9 = arith.cmpi eq, %arg1, %c0_i32_8 : i32
    %c0_i32_9 = arith.constant 0 : i32
    %10 = arith.cmpi eq, %arg2, %c0_i32_9 : i32
    %11 = arith.andi %9, %10 : i1
    %12 = arith.extui %11 : i1 to i32
    %c0_i32_10 = arith.constant 0 : i32
    %13 = arith.cmpi ne, %12, %c0_i32_10 : i32
    scf.if %13 {
      %cst_15 = arith.constant 0.000000e+00 : f32
      %20 = vector.broadcast %cst_15 : f32 to vector<16x128xf32>
      %c0_16 = arith.constant 0 : index
      %c0_17 = arith.constant 0 : index
      %21 = vector.load %arg10[%c0_16, %c0_17] : memref<16x128xf32, #tpu.memory_space<vmem>>, vector<16x128xf32>
      tpu.vector_store %arg10[%c0_16, %c0_17], %20 {strides = array<i32>} : memref<16x128xf32, #tpu.memory_space<vmem>>, vector<16x128xf32>,
    } else {
    }
    %c0_i32_11 = arith.constant 0 : i32
    %14 = arith.cmpi eq, %arg1, %c0_i32_11 : i32
    %15 = arith.extui %14 : i1 to i32
    %c0_i32_12 = arith.constant 0 : i32
    %16 = arith.cmpi ne, %15, %c0_i32_12 : i32
    scf.if %16 {
      %c128_i32 = arith.constant 128 : i32
      %20 = arith.muli %arg2, %c128_i32 : i32
      %21 = tpu.assume_multiple %20, 128 : i32
      %22 = arith.index_cast %21 : i32 to index
      %c0_15 = arith.constant 0 : index
      %23 = vector.load %arg5[%22, %c0_15] : memref<128x128xf32, #tpu.memory_space<vmem>>, vector<128x128xf32>
      %c0_16 = arith.constant 0 : index
      %c0_17 = arith.constant 0 : index
      %24 = vector.load %arg10[%c0_16, %c0_17] : memref<16x128xf32, #tpu.memory_space<vmem>>, vector<16x128xf32>
      %cst_18 = arith.constant dense<0.000000e+00> : vector<16x128xf32>
      %25 = tpu.matmul %3, %23, %cst_18 {dimension_numbers = #tpu.dot_dimension_numbers<[1], [0], [0], [1], [0, 0, 1, 1], [], []>} : vector<16x128xf32>, vector<128x128xf32>, vector<16x128xf32> -> vector<16x128xf32>
      %26 = arith.addf %24, %25 : vector<16x128xf32>
      %c0_19 = arith.constant 0 : index
      %c0_20 = arith.constant 0 : index
      %27 = vector.load %arg10[%c0_19, %c0_20] : memref<16x128xf32, #tpu.memory_space<vmem>>, vector<16x128xf32>
      tpu.vector_store %arg10[%c0_19, %c0_20], %26 {strides = array<i32>} : memref<16x128xf32, #tpu.memory_space<vmem>>, vector<16x128xf32>,
    } else {
    }
    %c0_i32_13 = arith.constant 0 : i32
    %17 = arith.cmpi eq, %arg2, %c0_i32_13 : i32
    %18 = arith.extui %17 : i1 to i32
    %c0_i32_14 = arith.constant 0 : i32
    %19 = arith.cmpi ne, %18, %c0_i32_14 : i32
    scf.if %19 {
      %c0_15 = arith.constant 0 : index
      %c0_16 = arith.constant 0 : index
      %20 = vector.load %arg10[%c0_15, %c0_16] : memref<16x128xf32, #tpu.memory_space<vmem>>, vector<16x128xf32>
      %c0_17 = arith.constant 0 : index
      %c0_18 = arith.constant 0 : index
      %21 = vector.load %arg6[%c0_17, %c0_18] : memref<128x128xf32, #tpu.memory_space<vmem>>, vector<128x128xf32>
      %cst_19 = arith.constant dense<0.000000e+00> : vector<16x128xf32>
      %22 = tpu.matmul %20, %21, %cst_19 {dimension_numbers = #tpu.dot_dimension_numbers<[1], [0], [0], [1], [0, 0, 1, 1], [], []>} : vector<16x128xf32>, vector<128x128xf32>, vector<16x128xf32> -> vector<16x128xf32>
      %c0_20 = arith.constant 0 : index
      %c0_21 = arith.constant 0 : index
      %23 = vector.load %arg9[%c0_20, %c0_21] : memref<16x128xf32, #tpu.memory_space<vmem>>, vector<16x128xf32>
      %24 = arith.addf %23, %22 : vector<16x128xf32>
      %c0_22 = arith.constant 0 : index
      %c0_23 = arith.constant 0 : index
      %25 = vector.load %arg7[%c0_22, %c0_23] : memref<1x128xf32, #tpu.memory_space<vmem>>, vector<1x128xf32>
      %26 = vector.broadcast %25 : vector<1x128xf32> to vector<16x128xf32>
      %27 = arith.addf %24, %26 : vector<16x128xf32>
      %c0_24 = arith.constant 0 : index
      %c0_25 = arith.constant 0 : index
      %28 = vector.load %arg8[%c0_24, %c0_25] : memref<16x128xf32, #tpu.memory_space<vmem>>, vector<16x128xf32>
      tpu.vector_store %arg8[%c0_24, %c0_25], %27 {strides = array<i32>} : memref<16x128xf32, #tpu.memory_space<vmem>>, vector<16x128xf32>,
    } else {
    }
    return
  }
  func.func @transform_0(%arg0: i32, %arg1: i32, %arg2: i32) -> (i32, i32) {
    %c0_i32 = arith.constant 0 : i32
    return %arg0, %arg2 : i32, i32
  }
  func.func @transform_1(%arg0: i32, %arg1: i32, %arg2: i32) -> (i32, i32) {
    %c0_i32 = arith.constant 0 : i32
    return %arg2, %arg1 : i32, i32
  }
  func.func @transform_2(%arg0: i32, %arg1: i32, %arg2: i32) -> (i32, i32) {
    %c0_i32 = arith.constant 0 : i32
    %c0_i32_0 = arith.constant 0 : i32
    %c0_i32_1 = arith.constant 0 : i32
    return %c0_i32, %c0_i32_0 : i32, i32
  }
  func.func @transform_3(%arg0: i32, %arg1: i32, %arg2: i32) -> (i32, i32) {
    %c0_i32 = arith.constant 0 : i32
    %c0_i32_0 = arith.constant 0 : i32
    return %c0_i32, %arg1 : i32, i32
  }
  func.func @transform_4(%arg0: i32, %arg1: i32, %arg2: i32) -> (i32, i32) {
    %c0_i32 = arith.constant 0 : i32
    %c0_i32_0 = arith.constant 0 : i32
    return %c0_i32, %arg1 : i32, i32
  }
  func.func @transform_5(%arg0: i32, %arg1: i32, %arg2: i32) -> (i32, i32) {
    %c0_i32 = arith.constant 0 : i32
    return %arg0, %arg1 : i32, i32
  }
}

</mosaic_0001>

<llo_original>
// kernel: tpu_custom_call.1
$region0: #{tpu_custom_call.1}
  #allocation0 [shape = 'u32[]', space=smem, size = 0x4, offset = 0x4, fixed_abs, tag = 'smem constant byte address 0x4 - core index']
  #allocation1 [shape = 'u32[144,128]{1,0:T(1,128)}', space=vmem, size = 0x12000, scoped, tag = 'internal scratch']
  #allocation2 [shape = 'f32[16,128]{1,0:T(8,128)}', space=vmem, size = 0x2000, scoped, tag = 'scratch operand']
  #allocation3 [shape = 'f32[16,128]{1,0:T(8,128)}', space=vmem, size = 0x2000, scoped, tag = 'scratch operand']
  %s0 = inlined_call_operand.hbm [shape: f32[16,128], index: 0, kind: input, shape index: {}]
  %s1 = inlined_call_operand.hbm [shape: f32[128,128], index: 1, kind: input, shape index: {}]
  %s2 = inlined_call_operand.hbm [shape: f32[128,128], index: 2, kind: input, shape index: {}]
  %s3 = inlined_call_operand.hbm [shape: f32[128,128], index: 3, kind: input, shape index: {}]
  %s4 = inlined_call_operand.vmem [shape: f32[1,128], index: 4, kind: input, shape index: {}]
  %s5 = inlined_call_operand.hbm [shape: f32[16,128], index: 5, kind: output, shape index: {}]
  %s6 = sld [smem:[#allocation0]]
  $region62: #{tpu_custom_call.1} parent=0
    _
  %s8 = ssub.s32 1, %s6
  %s9 = scalar_select 0, %s8, %s6
  $region1: #{tpu_custom_call.1} parent=0
    #allocation4 [shape = 'u8[8192]{0}', space=vmem, size = 0x2000, scoped, tag = 'input window, operand 0, single buffered']
    #allocation5 [shape = 's32[1]{0}', space=sflag, size = 0x4, scoped, tag = 'scoped memory for tpu_custom_call.1']
    #allocation6 [shape = 's32[1]{0}', space=sflag, size = 0x4, scoped, tag = 'scoped memory for tpu_custom_call.1']
    #allocation7 [shape = 'u8[65536]{0}', space=vmem, size = 0x10000, scoped, tag = 'input window, operand 1, single buffered']
    #allocation8 [shape = 's32[1]{0}', space=sflag, size = 0x4, scoped, tag = 'scoped memory for tpu_custom_call.1']
    #allocation9 [shape = 'u8[65536]{0}', space=vmem, size = 0x10000, scoped, tag = 'input window, operand 2, single buffered']
    #allocation10 [shape = 'u8[65536]{0}', space=vmem, size = 0x10000, scoped, tag = 'input window, operand 3, single buffered']
    #allocation11 [shape = 's32[1]{0}', space=sflag, size = 0x4, scoped, tag = 'scoped memory for tpu_custom_call.1']
    #allocation12 [shape = 'u8[8192]{0}', space=vmem, size = 0x2000, scoped, tag = 'output window, operand 0, single buffered']
    %10 = vsyncpa [#allocation5], 0
    %11 = vsyncpa [#allocation8], 0
    %12 = vsyncpa [#allocation11], 0
    %13 = vsyncpa [#allocation6], 0
    // Predicated region
    $region2: #{tpu_custom_call.1} parent=1 // pred_check
      _
    $region3: #{tpu_custom_call.1} parent=1 // pred_check_branch
      %15 = sbr.rel (0) target = $region5
    $region4: #{tpu_custom_call.1} parent=1 // pred_region
      %s17 = ssub.s32 256, 256
      %18 = vsyncadd [#allocation5], %s17
      %s19 = sshll.u32 [#allocation4], 4
      %s20 = int_to_ptr.vmem [resolvable:$true] %s19
      %25 = dma.hbm_to_vmem [thread:$0]  %s0, 256, %s20, [#allocation5], 128, 128, 8
    $region5: #{tpu_custom_call.1} parent=1 // pred_fallthru
      _
    // Predicated region
    $region6: #{tpu_custom_call.1} parent=1 // pred_check
      _
    $region7: #{tpu_custom_call.1} parent=1 // pred_check_branch
      %27 = sbr.rel (0) target = $region9
    $region8: #{tpu_custom_call.1} parent=1 // pred_region
      %s29 = ssub.s32 2048, 2048
      %30 = vsyncadd [#allocation8], %s29
      %s31 = sshll.u32 [#allocation7], 4
      %s32 = int_to_ptr.vmem [resolvable:$true] %s31
      %37 = dma.hbm_to_vmem [thread:$0]  %s1, 2048, %s32, [#allocation8], 128, 128, 8
    $region9: #{tpu_custom_call.1} parent=1 // pred_fallthru
      _
    // Predicated region
    $region10: #{tpu_custom_call.1} parent=1 // pred_check
      _
    $region11: #{tpu_custom_call.1} parent=1 // pred_check_branch
      %39 = sbr.rel (0) target = $region13
    $region12: #{tpu_custom_call.1} parent=1 // pred_region
      %s41 = ssub.s32 2048, 2048
      %42 = vsyncadd [#allocation8], %s41
      %s43 = sshll.u32 [#allocation9], 4
      %s44 = int_to_ptr.vmem [resolvable:$true] %s43
      %49 = dma.hbm_to_vmem [thread:$0]  %s2, 2048, %s44, [#allocation8], 128, 128, 8
    $region13: #{tpu_custom_call.1} parent=1 // pred_fallthru
      _
    // Predicated region
    $region14: #{tpu_custom_call.1} parent=1 // pred_check
      _
    $region15: #{tpu_custom_call.1} parent=1 // pred_check_branch
      %51 = sbr.rel (0) target = $region17
    $region16: #{tpu_custom_call.1} parent=1 // pred_region
      %s53 = ssub.s32 2048, 2048
      %54 = vsyncadd [#allocation11], %s53
      %s55 = sshll.u32 [#allocation10], 4
      %s56 = int_to_ptr.vmem [resolvable:$true] %s55
      %61 = dma.hbm_to_vmem [thread:$0]  %s3, 2048, %s56, [#allocation11], 128, 128, 8
    $region17: #{tpu_custom_call.1} parent=1 // pred_fallthru
      _
    // Predicated region
    $region18: #{tpu_custom_call.1} parent=1 // pred_check
      _
    $region19: #{tpu_custom_call.1} parent=1 // pred_check_branch
      %63 = sbr.rel (0) target = $region21
    $region20: #{tpu_custom_call.1} parent=1 // pred_region
      _
    $region21: #{tpu_custom_call.1} parent=1 // pred_fallthru
      _
    // Predicated region
    $region22: #{tpu_custom_call.1} parent=1 // pred_check
      _
    $region23: #{tpu_custom_call.1} parent=1 // pred_check_branch
      %65 = sbr.rel (0) target = $region25
    $region24: #{tpu_custom_call.1} parent=1 // pred_region
      %66 = dma.done [#allocation5], 256
    $region25: #{tpu_custom_call.1} parent=1 // pred_fallthru
      _
    // Predicated region
    $region26: #{tpu_custom_call.1} parent=1 // pred_check
      _
    $region27: #{tpu_custom_call.1} parent=1 // pred_check_branch
      %68 = sbr.rel (0) target = $region29
    $region28: #{tpu_custom_call.1} parent=1 // pred_region
      %69 = dma.done [#allocation8], 2048
    $region29: #{tpu_custom_call.1} parent=1 // pred_fallthru
      _
    // Predicated region
    $region30: #{tpu_custom_call.1} parent=1 // pred_check
      _
    $region31: #{tpu_custom_call.1} parent=1 // pred_check_branch
      %71 = sbr.rel (0) target = $region33
    $region32: #{tpu_custom_call.1} parent=1 // pred_region
      %72 = dma.done [#allocation8], 2048
    $region33: #{tpu_custom_call.1} parent=1 // pred_fallthru
      _
    // Predicated region
    $region34: #{tpu_custom_call.1} parent=1 // pred_check
      _
    $region35: #{tpu_custom_call.1} parent=1 // pred_check_branch
      %74 = sbr.rel (0) target = $region37
    $region36: #{tpu_custom_call.1} parent=1 // pred_region
      %75 = dma.done [#allocation11], 2048
    $region37: #{tpu_custom_call.1} parent=1 // pred_fallthru
      _
    %p76 = scmp.eq.s32.totalorder 0, 0
    // Predicated region
    $region38: #{tpu_custom_call.1} parent=1 // pred_check
      %p77 = pneg %p76
    $region39: #{tpu_custom_call.1} parent=1 // pred_check_branch
      %79 = sbr.rel (%p77) target = $region41
    $region40: #{tpu_custom_call.1} parent=1 // pred_region
      %80 = vst [vmem:[#allocation2] sm:$0xff] 0.0
      %81 = vst [vmem:[#allocation2 + $0x8] sm:$0xff] 0.0
    $region41: #{tpu_custom_call.1} parent=1 // pred_fallthru
      _
    %v82 = vld [vmem:[#allocation4] sm:$0xff]
    %v83 = vld [vmem:[#allocation4 + $0x8] sm:$0xff]
    %v84 = vld [vmem:[#allocation2] sm:$0xff]
    %v85 = vld [vmem:[#allocation2 + $0x8] sm:$0xff]
    %v86 = vld [vmem:[#allocation7] sm:$0xff]
    %v87 = vld [vmem:[#allocation7 + $0x8] sm:$0xff]
    %v88 = vld [vmem:[#allocation7 + $0x10] sm:$0xff]
    %v89 = vld [vmem:[#allocation7 + $0x18] sm:$0xff]
    %v90 = vld [vmem:[#allocation7 + $0x20] sm:$0xff]
    %v91 = vld [vmem:[#allocation7 + $0x28] sm:$0xff]
    %v92 = vld [vmem:[#allocation7 + $0x30] sm:$0xff]
    %v93 = vld [vmem:[#allocation7 + $0x38] sm:$0xff]
    %v94 = vld [vmem:[#allocation7 + $0x40] sm:$0xff]
    %v95 = vld [vmem:[#allocation7 + $0x48] sm:$0xff]
    %v96 = vld [vmem:[#allocation7 + $0x50] sm:$0xff]
    %v97 = vld [vmem:[#allocation7 + $0x58] sm:$0xff]
    %v98 = vld [vmem:[#allocation7 + $0x60] sm:$0xff]
    %v99 = vld [vmem:[#allocation7 + $0x68] sm:$0xff]
    %v100 = vld [vmem:[#allocation7 + $0x70] sm:$0xff]
    %v101 = vld [vmem:[#allocation7 + $0x78] sm:$0xff]
    %102 = vmatprep.subr.mxu0 0.0
    %103 = vmatpush1.msra.mxu0 %v101
    %104 = vmatprep.subr.mxu0 0.0
    %105 = vmatpush1.msra.mxu0 %v100
    %106 = vmatprep.subr.mxu0 0.0
    %107 = vmatpush1.msra.mxu0 %v99
    %108 = vmatprep.subr.mxu0 0.0
    %109 = vmatpush1.msra.mxu0 %v98
    %110 = vmatprep.subr.mxu0 0.0
    %111 = vmatpush1.msra.mxu0 %v97
    %112 = vmatprep.subr.mxu0 0.0
    %113 = vmatpush1.msra.mxu0 %v96
    %114 = vmatprep.subr.mxu0 0.0
    %115 = vmatpush1.msra.mxu0 %v95
    %116 = vmatprep.subr.mxu0 0.0
    %117 = vmatpush1.msra.mxu0 %v94
    %118 = vmatprep.subr.mxu0 0.0
    %119 = vmatpush1.msra.mxu0 %v93
    %120 = vmatprep.subr.mxu0 0.0
    %121 = vmatpush1.msra.mxu0 %v92
    %122 = vmatprep.subr.mxu0 0.0
    %123 = vmatpush1.msra.mxu0 %v91
    %124 = vmatprep.subr.mxu0 0.0
    %125 = vmatpush1.msra.mxu0 %v90
    %126 = vmatprep.subr.mxu0 0.0
    %127 = vmatpush1.msra.mxu0 %v89
    %128 = vmatprep.subr.mxu0 0.0
    %129 = vmatpush1.msra.mxu0 %v88
    %130 = vmatprep.subr.mxu0 0.0
    %131 = vmatpush1.msra.mxu0 %v87
    %132 = vmatprep.subr.mxu0 0.0
    %133 = vmatpush1.msra.mxu0 %v86
    %134 = vmatprep.subr.mxu0 0.0
    %135 = vmatpush2.msra.mxu0 0.0
    %136 = vmatprep.subr.mxu0 0.0
    %137 = vmatpush2.msra.mxu0 0.0
    %138 = vmatprep.subr.mxu0 0.0
    %139 = vmatpush2.msra.mxu0 0.0
    %140 = vmatprep.subr.mxu0 0.0
    %141 = vmatpush2.msra.mxu0 0.0
    %142 = vmatprep.subr.mxu0 0.0
    %143 = vmatpush2.msra.mxu0 0.0
    %144 = vmatprep.subr.mxu0 0.0
    %145 = vmatpush2.msra.mxu0 0.0
    %146 = vmatprep.subr.mxu0 0.0
    %147 = vmatpush2.msra.mxu0 0.0
    %148 = vmatprep.subr.mxu0 0.0
    %149 = vmatpush2.msra.mxu0 0.0
    %150 = vmatprep.subr.mxu0 0.0
    %151 = vmatpush2.msra.mxu0 0.0
    %152 = vmatprep.subr.mxu0 0.0
    %153 = vmatpush2.msra.mxu0 0.0
    %154 = vmatprep.subr.mxu0 0.0
    %155 = vmatpush2.msra.mxu0 0.0
    %156 = vmatprep.subr.mxu0 0.0
    %157 = vmatpush2.msra.mxu0 0.0
    %158 = vmatprep.subr.mxu0 0.0
    %159 = vmatpush2.msra.mxu0 0.0
    %160 = vmatprep.subr.mxu0 0.0
    %161 = vmatpush2.msra.mxu0 0.0
    %162 = vmatprep.subr.mxu0 0.0
    %163 = vmatpush2.msra.mxu0 0.0
    %164 = vmatprep.subr.mxu0 0.0
    %165 = vmatpush2.msra.mxu0 0.0
    %166 = vmatprep.mubr.f32.mxu0 0.0
    %167 = vmatmul.mubr.f32.gmra.mxu0 %v82
    %v168 = vpop.f32.mrf.mxu0
    %v169 = vadd.f32 0.0, %v168
    %v170 = vpop.f32.mrf.mxu0
    %171 = vmatprep.mubr.f32.mxu0 0.0
    %172 = vmatmul.mubr.f32.gmra.mxu0 %v83
    %v173 = vpop.f32.mrf.mxu0
    %v174 = vadd.f32 0.0, %v173
    %v175 = vpop.f32.mrf.mxu0
    %176 = vdwg.mxu0
    %v177 = vadd.f32 %v84, %v169
    %v178 = vadd.f32 %v85, %v174
    %179 = vst [vmem:[#allocation2] sm:$0xff] %v177
    %180 = vst [vmem:[#allocation2 + $0x8] sm:$0xff] %v178
    %p181 = scmp.eq.s32.totalorder 0, 0
    %p182 = pnand %p181, %p76
    %p183 = pneg %p182
    // Predicated region
    $region42: #{tpu_custom_call.1} parent=1 // pred_check
      _
    $region43: #{tpu_custom_call.1} parent=1 // pred_check_branch
      %185 = sbr.rel (%p182) target = $region45
    $region44: #{tpu_custom_call.1} parent=1 // pred_region
      %186 = vst [vmem:[#allocation3] sm:$0xff] 0.0
      %187 = vst [vmem:[#allocation3 + $0x8] sm:$0xff] 0.0
    $region45: #{tpu_custom_call.1} parent=1 // pred_fallthru
      _
    // Predicated region
    $region46: #{tpu_custom_call.1} parent=1 // pred_check
      %p188 = pneg %p181
    $region47: #{tpu_custom_call.1} parent=1 // pred_check_branch
      %190 = sbr.rel (%p188) target = $region49
    $region48: #{tpu_custom_call.1} parent=1 // pred_region
      %s191 = smul.u32 0, 128
      %s192 = scalar_lea.vmem [#allocation9], %s191
      %v193 = vld [vmem:[%s192] sm:$0xff]
      %v194 = vld [vmem:[%s192 + $0x8] sm:$0xff]
      %v195 = vld [vmem:[%s192 + $0x10] sm:$0xff]
      %v196 = vld [vmem:[%s192 + $0x18] sm:$0xff]
      %v197 = vld [vmem:[%s192 + $0x20] sm:$0xff]
      %v198 = vld [vmem:[%s192 + $0x28] sm:$0xff]
      %v199 = vld [vmem:[%s192 + $0x30] sm:$0xff]
      %v200 = vld [vmem:[%s192 + $0x38] sm:$0xff]
      %v201 = vld [vmem:[%s192 + $0x40] sm:$0xff]
      %v202 = vld [vmem:[%s192 + $0x48] sm:$0xff]
      %v203 = vld [vmem:[%s192 + $0x50] sm:$0xff]
      %v204 = vld [vmem:[%s192 + $0x58] sm:$0xff]
      %v205 = vld [vmem:[%s192 + $0x60] sm:$0xff]
      %v206 = vld [vmem:[%s192 + $0x68] sm:$0xff]
      %v207 = vld [vmem:[%s192 + $0x70] sm:$0xff]
      %v208 = vld [vmem:[%s192 + $0x78] sm:$0xff]
      %v209 = vld [vmem:[#allocation3] sm:$0xff]
      %v210 = vld [vmem:[#allocation3 + $0x8] sm:$0xff]
      %211 = vmatprep.subr.mxu0 0.0
      %212 = vmatpush1.msra.mxu0 %v208
      %213 = vmatprep.subr.mxu0 0.0
      %214 = vmatpush1.msra.mxu0 %v207
      %215 = vmatprep.subr.mxu0 0.0
      %216 = vmatpush1.msra.mxu0 %v206
      %217 = vmatprep.subr.mxu0 0.0
      %218 = vmatpush1.msra.mxu0 %v205
      %219 = vmatprep.subr.mxu0 0.0
      %220 = vmatpush1.msra.mxu0 %v204
      %221 = vmatprep.subr.mxu0 0.0
      %222 = vmatpush1.msra.mxu0 %v203
      %223 = vmatprep.subr.mxu0 0.0
      %224 = vmatpush1.msra.mxu0 %v202
      %225 = vmatprep.subr.mxu0 0.0
      %226 = vmatpush1.msra.mxu0 %v201
      %227 = vmatprep.subr.mxu0 0.0
      %228 = vmatpush1.msra.mxu0 %v200
      %229 = vmatprep.subr.mxu0 0.0
      %230 = vmatpush1.msra.mxu0 %v199
      %231 = vmatprep.subr.mxu0 0.0
      %232 = vmatpush1.msra.mxu0 %v198
      %233 = vmatprep.subr.mxu0 0.0
      %234 = vmatpush1.msra.mxu0 %v197
      %235 = vmatprep.subr.mxu0 0.0
      %236 = vmatpush1.msra.mxu0 %v196
      %237 = vmatprep.subr.mxu0 0.0
      %238 = vmatpush1.msra.mxu0 %v195
      %239 = vmatprep.subr.mxu0 0.0
      %240 = vmatpush1.msra.mxu0 %v194
      %241 = vmatprep.subr.mxu0 0.0
      %242 = vmatpush1.msra.mxu0 %v193
      %243 = vmatprep.subr.mxu0 0.0
      %244 = vmatpush2.msra.mxu0 0.0
      %245 = vmatprep.subr.mxu0 0.0
      %246 = vmatpush2.msra.mxu0 0.0
      %247 = vmatprep.subr.mxu0 0.0
      %248 = vmatpush2.msra.mxu0 0.0
      %249 = vmatprep.subr.mxu0 0.0
      %250 = vmatpush2.msra.mxu0 0.0
      %251 = vmatprep.subr.mxu0 0.0
      %252 = vmatpush2.msra.mxu0 0.0
      %253 = vmatprep.subr.mxu0 0.0
      %254 = vmatpush2.msra.mxu0 0.0
      %255 = vmatprep.subr.mxu0 0.0
      %256 = vmatpush2.msra.mxu0 0.0
      %257 = vmatprep.subr.mxu0 0.0
      %258 = vmatpush2.msra.mxu0 0.0
      %259 = vmatprep.subr.mxu0 0.0
      %260 = vmatpush2.msra.mxu0 0.0
      %261 = vmatprep.subr.mxu0 0.0
      %262 = vmatpush2.msra.mxu0 0.0
      %263 = vmatprep.subr.mxu0 0.0
      %264 = vmatpush2.msra.mxu0 0.0
      %265 = vmatprep.subr.mxu0 0.0
      %266 = vmatpush2.msra.mxu0 0.0
      %267 = vmatprep.subr.mxu0 0.0
      %268 = vmatpush2.msra.mxu0 0.0
      %269 = vmatprep.subr.mxu0 0.0
      %270 = vmatpush2.msra.mxu0 0.0
      %271 = vmatprep.subr.mxu0 0.0
      %272 = vmatpush2.msra.mxu0 0.0
      %273 = vmatprep.subr.mxu0 0.0
      %274 = vmatpush2.msra.mxu0 0.0
      %275 = vmatprep.mubr.f32.mxu0 0.0
      %276 = vmatmul.mubr.f32.gmra.mxu0 %v82
      %v277 = vpop.f32.mrf.mxu0
      %v278 = vadd.f32 0.0, %v277
      %v279 = vpop.f32.mrf.mxu0
      %280 = vmatprep.mubr.f32.mxu0 0.0
      %281 = vmatmul.mubr.f32.gmra.mxu0 %v83
      %v282 = vpop.f32.mrf.mxu0
      %v283 = vadd.f32 0.0, %v282
      %v284 = vpop.f32.mrf.mxu0
      %285 = vdwg.mxu0
      %v286 = vadd.f32 %v209, %v278
      %v287 = vadd.f32 %v210, %v283
      %288 = vst [vmem:[#allocation3] sm:$0xff] %v286
      %289 = vst [vmem:[#allocation3 + $0x8] sm:$0xff] %v287
    $region49: #{tpu_custom_call.1} parent=1 // pred_fallthru
      _
    // Predicated region
    $region50: #{tpu_custom_call.1} parent=1 // pred_check
      %p290 = pneg %p76
    $region51: #{tpu_custom_call.1} parent=1 // pred_check_branch
      %292 = sbr.rel (%p290) target = $region53
    $region52: #{tpu_custom_call.1} parent=1 // pred_region
      %v293 = vld [vmem:[#allocation3] sm:$0xff]
      %v294 = vld [vmem:[#allocation3 + $0x8] sm:$0xff]
      %v295 = vld [vmem:[#allocation10] sm:$0xff]
      %v296 = vld [vmem:[#allocation10 + $0x8] sm:$0xff]
      %v297 = vld [vmem:[#allocation10 + $0x10] sm:$0xff]
      %v298 = vld [vmem:[#allocation10 + $0x18] sm:$0xff]
      %v299 = vld [vmem:[#allocation10 + $0x20] sm:$0xff]
      %v300 = vld [vmem:[#allocation10 + $0x28] sm:$0xff]
      %v301 = vld [vmem:[#allocation10 + $0x30] sm:$0xff]
      %v302 = vld [vmem:[#allocation10 + $0x38] sm:$0xff]
      %v303 = vld [vmem:[#allocation10 + $0x40] sm:$0xff]
      %v304 = vld [vmem:[#allocation10 + $0x48] sm:$0xff]
      %v305 = vld [vmem:[#allocation10 + $0x50] sm:$0xff]
      %v306 = vld [vmem:[#allocation10 + $0x58] sm:$0xff]
      %v307 = vld [vmem:[#allocation10 + $0x60] sm:$0xff]
      %v308 = vld [vmem:[#allocation10 + $0x68] sm:$0xff]
      %v309 = vld [vmem:[#allocation10 + $0x70] sm:$0xff]
      %v310 = vld [vmem:[#allocation10 + $0x78] sm:$0xff]
      %311 = vmatprep.subr.mxu0 0.0
      %312 = vmatpush1.msra.mxu0 %v310
      %313 = vmatprep.subr.mxu0 0.0
      %314 = vmatpush1.msra.mxu0 %v309
      %315 = vmatprep.subr.mxu0 0.0
      %316 = vmatpush1.msra.mxu0 %v308
      %317 = vmatprep.subr.mxu0 0.0
      %318 = vmatpush1.msra.mxu0 %v307
      %319 = vmatprep.subr.mxu0 0.0
      %320 = vmatpush1.msra.mxu0 %v306
      %321 = vmatprep.subr.mxu0 0.0
      %322 = vmatpush1.msra.mxu0 %v305
      %323 = vmatprep.subr.mxu0 0.0
      %324 = vmatpush1.msra.mxu0 %v304
      %325 = vmatprep.subr.mxu0 0.0
      %326 = vmatpush1.msra.mxu0 %v303
      %327 = vmatprep.subr.mxu0 0.0
      %328 = vmatpush1.msra.mxu0 %v302
      %329 = vmatprep.subr.mxu0 0.0
      %330 = vmatpush1.msra.mxu0 %v301
      %331 = vmatprep.subr.mxu0 0.0
      %332 = vmatpush1.msra.mxu0 %v300
      %333 = vmatprep.subr.mxu0 0.0
      %334 = vmatpush1.msra.mxu0 %v299
      %335 = vmatprep.subr.mxu0 0.0
      %336 = vmatpush1.msra.mxu0 %v298
      %337 = vmatprep.subr.mxu0 0.0
      %338 = vmatpush1.msra.mxu0 %v297
      %339 = vmatprep.subr.mxu0 0.0
      %340 = vmatpush1.msra.mxu0 %v296
      %341 = vmatprep.subr.mxu0 0.0
      %342 = vmatpush1.msra.mxu0 %v295
      %343 = vmatprep.subr.mxu0 0.0
      %344 = vmatpush2.msra.mxu0 0.0
      %345 = vmatprep.subr.mxu0 0.0
      %346 = vmatpush2.msra.mxu0 0.0
      %347 = vmatprep.subr.mxu0 0.0
      %348 = vmatpush2.msra.mxu0 0.0
      %349 = vmatprep.subr.mxu0 0.0
      %350 = vmatpush2.msra.mxu0 0.0
      %351 = vmatprep.subr.mxu0 0.0
      %352 = vmatpush2.msra.mxu0 0.0
      %353 = vmatprep.subr.mxu0 0.0
      %354 = vmatpush2.msra.mxu0 0.0
      %355 = vmatprep.subr.mxu0 0.0
      %356 = vmatpush2.msra.mxu0 0.0
      %357 = vmatprep.subr.mxu0 0.0
      %358 = vmatpush2.msra.mxu0 0.0
      %359 = vmatprep.subr.mxu0 0.0
      %360 = vmatpush2.msra.mxu0 0.0
      %361 = vmatprep.subr.mxu0 0.0
      %362 = vmatpush2.msra.mxu0 0.0
      %363 = vmatprep.subr.mxu0 0.0
      %364 = vmatpush2.msra.mxu0 0.0
      %365 = vmatprep.subr.mxu0 0.0
      %366 = vmatpush2.msra.mxu0 0.0
      %367 = vmatprep.subr.mxu0 0.0
      %368 = vmatpush2.msra.mxu0 0.0
      %369 = vmatprep.subr.mxu0 0.0
      %370 = vmatpush2.msra.mxu0 0.0
      %371 = vmatprep.subr.mxu0 0.0
      %372 = vmatpush2.msra.mxu0 0.0
      %373 = vmatprep.subr.mxu0 0.0
      %374 = vmatpush2.msra.mxu0 0.0
      %375 = vmatprep.mubr.f32.mxu0 0.0
      %376 = vmatmul.mubr.f32.gmra.mxu0 %v293
      %v377 = vpop.f32.mrf.mxu0
      %v378 = vadd.f32 0.0, %v377
      %v379 = vpop.f32.mrf.mxu0
      %380 = vmatprep.mubr.f32.mxu0 0.0
      %381 = vmatmul.mubr.f32.gmra.mxu0 %v294
      %v382 = vpop.f32.mrf.mxu0
      %v383 = vadd.f32 0.0, %v382
      %v384 = vpop.f32.mrf.mxu0
      %385 = vdwg.mxu0
      %v386 = vld [vmem:[#allocation2] sm:$0xff]
      %v387 = vld [vmem:[#allocation2 + $0x8] sm:$0xff]
      %v388 = vadd.f32 %v386, %v378
      %v389 = vadd.f32 %v387, %v383
      %v390 = vld [vmem:[%s4] sm:$0x1]
      %v392 = vlaneseq
      %v393 = vshrl.u32 %v392, 7
      %v394 = vsub.s32 0, %v393
      %v395 = vrot.slane %v390, %v394
      %v397 = vadd.f32 %v388, %v395
      %v398 = vadd.f32 %v389, %v395
      %399 = vst [vmem:[#allocation12] sm:$0xff] %v397
      %400 = vst [vmem:[#allocation12 + $0x8] sm:$0xff] %v398
    $region53: #{tpu_custom_call.1} parent=1 // pred_fallthru
      _
    // Predicated region
    $region54: #{tpu_custom_call.1} parent=1 // pred_check
      _
    $region55: #{tpu_custom_call.1} parent=1 // pred_check_branch
      %402 = sbr.rel (0) target = $region57
    $region56: #{tpu_custom_call.1} parent=1 // pred_region
      %s404 = ssub.s32 256, 256
      %405 = vsyncadd [#allocation6], %s404
      %s406 = sshll.u32 [#allocation12], 4
      %s407 = int_to_ptr.vmem [resolvable:$true] %s406
      %412 = dma.vmem_to_hbm [thread:$0]  %s407, 256, %s5, [#allocation6], 128, 128, 8
    $region57: #{tpu_custom_call.1} parent=1 // pred_fallthru
      _
    // Predicated region
    $region58: #{tpu_custom_call.1} parent=1 // pred_check
      _
    $region59: #{tpu_custom_call.1} parent=1 // pred_check_branch
      %414 = sbr.rel (0) target = $region61
    $region60: #{tpu_custom_call.1} parent=1 // pred_region
      %415 = dma.done [#allocation6], 256
    $region61: #{tpu_custom_call.1} parent=1 // pred_fallthru
      _
    %416 = vsyncpa [#allocation5], 1
    %417 = vsyncpa [#allocation8], 1
    %418 = vsyncpa [#allocation11], 1
    %419 = vsyncpa [#allocation6], 1

</llo_original>
